<compile_context>
chip_gen: v5e
topology: v5e:2x2
jax: 0.10.0
libtpu: 0.0.40
codegen_flags: <defaults>
</compile_context>

<pallas_src>
import functools

import numpy as np

import jax
import jax.numpy as jnp
from jax import lax
from jax.experimental import pallas as pl
from jax.experimental.pallas import tpu as pltpu


def _resblock_kernel(x_ref, masks_ref, w1_ref, b1_ref, w2_ref, b2_ref, o_ref, *,
                     H, W, K, res_scale):
    """One batch element per grid step; conv -> relu -> conv + residual fused.

    x_ref:     (1, C, H*W)    sample; channels on sublanes, H*W on lanes
    masks_ref: (K*K, H*W)     per-tap boundary masks (1.0 valid / 0.0 pad)
    w*_ref:    (C, K*K*C)     OIHW weights flattened tap-major for im2col matmul
    b*_ref:    (C, 1)
    o_ref:     (1, C, H*W)
    """
    L = H * W
    P = K // 2

    x = x_ref[0]          # (C, L) f32 -- also the residual
    m = masks_ref[...]    # (K*K, L) f32

    def im2col(src):
        # Build the (K*K*C, L) patch matrix: each tap = lane roll (XLU) +
        # boundary-mask multiply (VPU).  No slices, no reshapes, no padding.
        parts = []
        for kh in range(K):
            for kw in range(K):
                dh, dw = kh - P, kw - P
                shift = dh * W + dw
                shifted = src if shift == 0 else pltpu.roll(src, (-shift) % L, 1)
                if dh == 0 and dw == 0:
                    parts.append(shifted)                     # center tap: mask is all-ones
                else:
                    parts.append(shifted * m[kh * K + kw])    # (C,L)*(L,) bcast
        return jnp.concatenate(parts, axis=0)                 # (K*K*C, L)

    # conv1 + bias + ReLU: one deep matmul, contraction = K*K*C.
    y1 = jnp.dot(w1_ref[...], im2col(x), preferred_element_type=jnp.float32)
    y1 = jnp.maximum(y1 + b1_ref[...], 0.0)

    # conv2 + bias (same masked-roll im2col; zero padding never materialized).
    y2 = jnp.dot(w2_ref[...], im2col(y1), preferred_element_type=jnp.float32)
    y2 = y2 + b2_ref[...]

    # residual: res_scale * body(x) + x   (lane-dense store, L % 128 == 0 here)
    o_ref[0] = (y2 * res_scale + x).astype(o_ref.dtype)


def resblock_forward(x_nchw, w1, b1, w2, b2, *, res_scale=1.0):
    """x_nchw: (N, C, H, W) f32.  w*: (Cout, Cin, K, K) PyTorch OIHW.  b*: (Cout,)."""
    N, C, H, W = x_nchw.shape
    Cout, Cin, K, _ = w1.shape
    assert Cout == C and Cin == C
    P = K // 2
    L = H * W

    # Free reshape (contiguous flatten) -- no transpose, no pad, no HBM copies.
    x_flat = x_nchw.reshape(N, C, L)

    # OIHW -> (Cout, K*K*Cin), tap-major (kh, kw, cin) to match im2col stacking.
    w1f = jnp.transpose(w1, (0, 2, 3, 1)).reshape(C, K * K * C)
    w2f = jnp.transpose(w2, (0, 2, 3, 1)).reshape(C, K * K * C)
    b1r = b1.reshape(C, 1)
    b2r = b2.reshape(C, 1)

    # Tiny compile-time boundary masks: masks[t, h*W + w] == 1 iff tap
    # t = kh*K + kw reads an in-bounds pixel at output position (h, w).
    masks_np = np.zeros((K * K, L), np.float32)
    for kh in range(K):
        for kw in range(K):
            dh, dw = kh - P, kw - P
            mhw = np.zeros((H, W), np.float32)
            mhw[max(0, -dh):min(H, H - dh), max(0, -dw):min(W, W - dw)] = 1.0
            masks_np[kh * K + kw] = mhw.reshape(L)
    masks = jnp.asarray(masks_np)

    kernel = functools.partial(_resblock_kernel, H=H, W=W, K=K,
                               res_scale=float(res_scale))

    itemsize = 4
    flops = N * (2 * 2 * C * (K * K * C) * L)                 # two im2col matmuls
    bytes_accessed = (2 * N * C * L + 2 * C * K * K * C + 2 * C
                      + K * K * L) * itemsize

    out_flat = pl.pallas_call(
        kernel,
        out_shape=jax.ShapeDtypeStruct((N, C, L), x_nchw.dtype),
        grid=(N,),
        in_specs=[
            pl.BlockSpec((1, C, L), lambda n: (n, 0, 0)),       # x (also residual)
            pl.BlockSpec((K * K, L), lambda n: (0, 0)),         # boundary masks
            pl.BlockSpec((C, K * K * C), lambda n: (0, 0)),     # w1 (im2col layout)
            pl.BlockSpec((C, 1), lambda n: (0, 0)),             # b1
            pl.BlockSpec((C, K * K * C), lambda n: (0, 0)),     # w2 (im2col layout)
            pl.BlockSpec((C, 1), lambda n: (0, 0)),             # b2
        ],
        out_specs=pl.BlockSpec((1, C, L), lambda n: (n, 0, 0)),
        compiler_params=pltpu.CompilerParams(
            dimension_semantics=("parallel",)),
        cost_estimate=pl.CostEstimate(flops=flops, transcendentals=0,
                                      bytes_accessed=bytes_accessed),
    )(x_flat, masks, w1f, b1r, w2f, b2r)

    return out_flat.reshape(N, C, H, W)


def _reference_resblock(x, w1, b1, w2, b2, res_scale=1.0):
    """Pure-JAX reference matching the PyTorch forward (NCHW / OIHW)."""
    P = w1.shape[-1] // 2
    dn = ("NCHW", "OIHW", "NCHW")

    def conv(x, w, b):
        y = lax.conv_general_dilated(x, w, window_strides=(1, 1),
                                     padding=((P, P), (P, P)),
                                     dimension_numbers=dn)
        return y + b.reshape(1, -1, 1, 1)

    res = conv(jnp.maximum(conv(x, w1, b1), 0.0), w2, b2) * res_scale
    return res + x


if __name__ == "__main__":
    # Small deterministic problem: N=2, C(n_feats)=4, H=W=16, kernel_size=3.
    N, C, H, W, K = 2, 4, 16, 16, 3
    res_scale = 1.0

    key = jax.random.PRNGKey(0)
    kx, kw1, kb1, kw2, kb2 = jax.random.split(key, 5)
    x = jax.random.normal(kx, (N, C, H, W), dtype=jnp.float32)
    w1 = jax.random.normal(kw1, (C, C, K, K), dtype=jnp.float32) * 0.1
    b1 = jax.random.normal(kb1, (C,), dtype=jnp.float32) * 0.1
    w2 = jax.random.normal(kw2, (C, C, K, K), dtype=jnp.float32) * 0.1
    b2 = jax.random.normal(kb2, (C,), dtype=jnp.float32) * 0.1

    out = resblock_forward(x, w1, b1, w2, b2, res_scale=res_scale)
    out = jax.block_until_ready(out)

    ref = _reference_resblock(x, w1, b1, w2, b2, res_scale=res_scale)
    assert out.shape == (N, C, H, W)
    assert jnp.allclose(out, ref, rtol=1e-4, atol=1e-4), "mismatch vs reference"

    print("KERNEL_OK")
</pallas_src>

<mosaic_0001>
module attributes {stable_mosaic.version = 11 : i64} {
  func.func @_resblock_kernel(%arg0: i32, %arg1: memref<1x4x256xf32, #tpu.memory_space<vmem>>, %arg2: memref<9x256xf32, #tpu.memory_space<vmem>>, %arg3: memref<4x36xf32, #tpu.memory_space<vmem>>, %arg4: memref<4x1xf32, #tpu.memory_space<vmem>>, %arg5: memref<4x36xf32, #tpu.memory_space<vmem>>, %arg6: memref<4x1xf32, #tpu.memory_space<vmem>>, %arg7: memref<1x4x256xf32, #tpu.memory_space<vmem>>) attributes {dimension_semantics = [#tpu.dimension_semantics<parallel>], iteration_bounds = array<i64: 2>, scalar_prefetch = 0 : i64, scratch_operands = 0 : i64, tpu.core_type = #tpu.core_type<tc>, window_params = [{transform_indices = @transform_0, window_bounds = array<i64: 1, 4, 256>}, {pipeline_mode = #tpu.pipeline_mode<synchronous>, transform_indices = @transform_1, window_bounds = array<i64: 9, 256>}, {pipeline_mode = #tpu.pipeline_mode<synchronous>, transform_indices = @transform_2, window_bounds = array<i64: 4, 36>}, {pipeline_mode = #tpu.pipeline_mode<synchronous>, transform_indices = @transform_3, window_bounds = array<i64: 4, 1>}, {pipeline_mode = #tpu.pipeline_mode<synchronous>, transform_indices = @transform_4, window_bounds = array<i64: 4, 36>}, {pipeline_mode = #tpu.pipeline_mode<synchronous>, transform_indices = @transform_5, window_bounds = array<i64: 4, 1>}, {transform_indices = @transform_6, window_bounds = array<i64: 1, 4, 256>}]} {
    %c0 = arith.constant 0 : index
    %c0_0 = arith.constant 0 : index
    %c0_1 = arith.constant 0 : index
    %0 = vector.load %arg1[%c0, %c0_0, %c0_1] : memref<1x4x256xf32, #tpu.memory_space<vmem>>, vector<1x4x256xf32>
    %1 = vector.shape_cast %0 : vector<1x4x256xf32> to vector<4x256xf32>
    %c0_2 = arith.constant 0 : index
    %c0_3 = arith.constant 0 : index
    %2 = vector.load %arg2[%c0_2, %c0_3] : memref<9x256xf32, #tpu.memory_space<vmem>>, vector<9x256xf32>
    %c0_4 = arith.constant 0 : index
    %c0_5 = arith.constant 0 : index
    %3 = vector.load %arg3[%c0_4, %c0_5] : memref<4x36xf32, #tpu.memory_space<vmem>>, vector<4x36xf32>
    %c17_i32 = arith.constant 17 : i32
    %4 = tpu.dynamic_rotate %1 by %c17_i32 dim 1 : vector<4x256xf32>, i32 -> vector<4x256xf32>
    %5 = vector.extract_strided_slice %2 {offsets = [0, 0], sizes = [1, 256], strides = [1, 1]} : vector<9x256xf32> to vector<1x256xf32>
    %6 = vector.shape_cast %5 : vector<1x256xf32> to vector<256xf32>
    %7 = vector.shape_cast %6 : vector<256xf32> to vector<1x256xf32>
    %8 = vector.broadcast %7 : vector<1x256xf32> to vector<4x256xf32>
    %9 = arith.mulf %4, %8 : vector<4x256xf32>
    %c16_i32 = arith.constant 16 : i32
    %10 = tpu.dynamic_rotate %1 by %c16_i32 dim 1 : vector<4x256xf32>, i32 -> vector<4x256xf32>
    %11 = vector.extract_strided_slice %2 {offsets = [1, 0], sizes = [1, 256], strides = [1, 1]} : vector<9x256xf32> to vector<1x256xf32>
    %12 = vector.shape_cast %11 : vector<1x256xf32> to vector<256xf32>
    %13 = vector.shape_cast %12 : vector<256xf32> to vector<1x256xf32>
    %14 = vector.broadcast %13 : vector<1x256xf32> to vector<4x256xf32>
    %15 = arith.mulf %10, %14 : vector<4x256xf32>
    %c15_i32 = arith.constant 15 : i32
    %16 = tpu.dynamic_rotate %1 by %c15_i32 dim 1 : vector<4x256xf32>, i32 -> vector<4x256xf32>
    %17 = vector.extract_strided_slice %2 {offsets = [2, 0], sizes = [1, 256], strides = [1, 1]} : vector<9x256xf32> to vector<1x256xf32>
    %18 = vector.shape_cast %17 : vector<1x256xf32> to vector<256xf32>
    %19 = vector.shape_cast %18 : vector<256xf32> to vector<1x256xf32>
    %20 = vector.broadcast %19 : vector<1x256xf32> to vector<4x256xf32>
    %21 = arith.mulf %16, %20 : vector<4x256xf32>
    %c1_i32 = arith.constant 1 : i32
    %22 = tpu.dynamic_rotate %1 by %c1_i32 dim 1 : vector<4x256xf32>, i32 -> vector<4x256xf32>
    %23 = vector.extract_strided_slice %2 {offsets = [3, 0], sizes = [1, 256], strides = [1, 1]} : vector<9x256xf32> to vector<1x256xf32>
    %24 = vector.shape_cast %23 : vector<1x256xf32> to vector<256xf32>
    %25 = vector.shape_cast %24 : vector<256xf32> to vector<1x256xf32>
    %26 = vector.broadcast %25 : vector<1x256xf32> to vector<4x256xf32>
    %27 = arith.mulf %22, %26 : vector<4x256xf32>
    %c255_i32 = arith.constant 255 : i32
    %28 = tpu.dynamic_rotate %1 by %c255_i32 dim 1 : vector<4x256xf32>, i32 -> vector<4x256xf32>
    %29 = vector.extract_strided_slice %2 {offsets = [5, 0], sizes = [1, 256], strides = [1, 1]} : vector<9x256xf32> to vector<1x256xf32>
    %30 = vector.shape_cast %29 : vector<1x256xf32> to vector<256xf32>
    %31 = vector.shape_cast %30 : vector<256xf32> to vector<1x256xf32>
    %32 = vector.broadcast %31 : vector<1x256xf32> to vector<4x256xf32>
    %33 = arith.mulf %28, %32 : vector<4x256xf32>
    %c241_i32 = arith.constant 241 : i32
    %34 = tpu.dynamic_rotate %1 by %c241_i32 dim 1 : vector<4x256xf32>, i32 -> vector<4x256xf32>
    %35 = vector.extract_strided_slice %2 {offsets = [6, 0], sizes = [1, 256], strides = [1, 1]} : vector<9x256xf32> to vector<1x256xf32>
    %36 = vector.shape_cast %35 : vector<1x256xf32> to vector<256xf32>
    %37 = vector.shape_cast %36 : vector<256xf32> to vector<1x256xf32>
    %38 = vector.broadcast %37 : vector<1x256xf32> to vector<4x256xf32>
    %39 = arith.mulf %34, %38 : vector<4x256xf32>
    %c240_i32 = arith.constant 240 : i32
    %40 = tpu.dynamic_rotate %1 by %c240_i32 dim 1 : vector<4x256xf32>, i32 -> vector<4x256xf32>
    %41 = vector.extract_strided_slice %2 {offsets = [7, 0], sizes = [1, 256], strides = [1, 1]} : vector<9x256xf32> to vector<1x256xf32>
    %42 = vector.shape_cast %41 : vector<1x256xf32> to vector<256xf32>
    %43 = vector.shape_cast %42 : vector<256xf32> to vector<1x256xf32>
    %44 = vector.broadcast %43 : vector<1x256xf32> to vector<4x256xf32>
    %45 = arith.mulf %40, %44 : vector<4x256xf32>
    %c239_i32 = arith.constant 239 : i32
    %46 = tpu.dynamic_rotate %1 by %c239_i32 dim 1 : vector<4x256xf32>, i32 -> vector<4x256xf32>
    %47 = vector.extract_strided_slice %2 {offsets = [8, 0], sizes = [1, 256], strides = [1, 1]} : vector<9x256xf32> to vector<1x256xf32>
    %48 = vector.shape_cast %47 : vector<1x256xf32> to vector<256xf32>
    %49 = vector.shape_cast %48 : vector<256xf32> to vector<1x256xf32>
    %50 = vector.broadcast %49 : vector<1x256xf32> to vector<4x256xf32>
    %51 = arith.mulf %46, %50 : vector<4x256xf32>
    %52 = tpu.concatenate %9, %15, %21, %27, %1, %33, %39, %45, %51 in 0 : vector<4x256xf32>, vector<4x256xf32>, vector<4x256xf32>, vector<4x256xf32>, vector<4x256xf32>, vector<4x256xf32>, vector<4x256xf32>, vector<4x256xf32>, vector<4x256xf32> -> vector<36x256xf32>
    %cst = arith.constant dense<0.000000e+00> : vector<4x256xf32>
    %53 = tpu.matmul %3, %52, %cst {dimension_numbers = #tpu.dot_dimension_numbers<[1], [0], [0], [1], [0, 0, 1, 1], [], []>} : vector<4x36xf32>, vector<36x256xf32>, vector<4x256xf32> -> vector<4x256xf32>
    %c0_6 = arith.constant 0 : index
    %c0_7 = arith.constant 0 : index
    %54 = vector.load %arg4[%c0_6, %c0_7] : memref<4x1xf32, #tpu.memory_space<vmem>>, vector<4x1xf32>
    %55 = vector.broadcast %54 : vector<4x1xf32> to vector<4x256xf32>
    %56 = arith.addf %53, %55 : vector<4x256xf32>
    %cst_8 = arith.constant 0.000000e+00 : f32
    %57 = vector.broadcast %cst_8 : f32 to vector<4x256xf32>
    %58 = arith.maximumf %56, %57 : vector<4x256xf32>
    %c0_9 = arith.constant 0 : index
    %c0_10 = arith.constant 0 : index
    %59 = vector.load %arg5[%c0_9, %c0_10] : memref<4x36xf32, #tpu.memory_space<vmem>>, vector<4x36xf32>
    %c17_i32_11 = arith.constant 17 : i32
    %60 = tpu.dynamic_rotate %58 by %c17_i32_11 dim 1 : vector<4x256xf32>, i32 -> vector<4x256xf32>
    %61 = vector.extract_strided_slice %2 {offsets = [0, 0], sizes = [1, 256], strides = [1, 1]} : vector<9x256xf32> to vector<1x256xf32>
    %62 = vector.shape_cast %61 : vector<1x256xf32> to vector<256xf32>
    %63 = vector.shape_cast %62 : vector<256xf32> to vector<1x256xf32>
    %64 = vector.broadcast %63 : vector<1x256xf32> to vector<4x256xf32>
    %65 = arith.mulf %60, %64 : vector<4x256xf32>
    %c16_i32_12 = arith.constant 16 : i32
    %66 = tpu.dynamic_rotate %58 by %c16_i32_12 dim 1 : vector<4x256xf32>, i32 -> vector<4x256xf32>
    %67 = vector.extract_strided_slice %2 {offsets = [1, 0], sizes = [1, 256], strides = [1, 1]} : vector<9x256xf32> to vector<1x256xf32>
    %68 = vector.shape_cast %67 : vector<1x256xf32> to vector<256xf32>
    %69 = vector.shape_cast %68 : vector<256xf32> to vector<1x256xf32>
    %70 = vector.broadcast %69 : vector<1x256xf32> to vector<4x256xf32>
    %71 = arith.mulf %66, %70 : vector<4x256xf32>
    %c15_i32_13 = arith.constant 15 : i32
    %72 = tpu.dynamic_rotate %58 by %c15_i32_13 dim 1 : vector<4x256xf32>, i32 -> vector<4x256xf32>
    %73 = vector.extract_strided_slice %2 {offsets = [2, 0], sizes = [1, 256], strides = [1, 1]} : vector<9x256xf32> to vector<1x256xf32>
    %74 = vector.shape_cast %73 : vector<1x256xf32> to vector<256xf32>
    %75 = vector.shape_cast %74 : vector<256xf32> to vector<1x256xf32>
    %76 = vector.broadcast %75 : vector<1x256xf32> to vector<4x256xf32>
    %77 = arith.mulf %72, %76 : vector<4x256xf32>
    %c1_i32_14 = arith.constant 1 : i32
    %78 = tpu.dynamic_rotate %58 by %c1_i32_14 dim 1 : vector<4x256xf32>, i32 -> vector<4x256xf32>
    %79 = vector.extract_strided_slice %2 {offsets = [3, 0], sizes = [1, 256], strides = [1, 1]} : vector<9x256xf32> to vector<1x256xf32>
    %80 = vector.shape_cast %79 : vector<1x256xf32> to vector<256xf32>
    %81 = vector.shape_cast %80 : vector<256xf32> to vector<1x256xf32>
    %82 = vector.broadcast %81 : vector<1x256xf32> to vector<4x256xf32>
    %83 = arith.mulf %78, %82 : vector<4x256xf32>
    %c255_i32_15 = arith.constant 255 : i32
    %84 = tpu.dynamic_rotate %58 by %c255_i32_15 dim 1 : vector<4x256xf32>, i32 -> vector<4x256xf32>
    %85 = vector.extract_strided_slice %2 {offsets = [5, 0], sizes = [1, 256], strides = [1, 1]} : vector<9x256xf32> to vector<1x256xf32>
    %86 = vector.shape_cast %85 : vector<1x256xf32> to vector<256xf32>
    %87 = vector.shape_cast %86 : vector<256xf32> to vector<1x256xf32>
    %88 = vector.broadcast %87 : vector<1x256xf32> to vector<4x256xf32>
    %89 = arith.mulf %84, %88 : vector<4x256xf32>
    %c241_i32_16 = arith.constant 241 : i32
    %90 = tpu.dynamic_rotate %58 by %c241_i32_16 dim 1 : vector<4x256xf32>, i32 -> vector<4x256xf32>
    %91 = vector.extract_strided_slice %2 {offsets = [6, 0], sizes = [1, 256], strides = [1, 1]} : vector<9x256xf32> to vector<1x256xf32>
    %92 = vector.shape_cast %91 : vector<1x256xf32> to vector<256xf32>
    %93 = vector.shape_cast %92 : vector<256xf32> to vector<1x256xf32>
    %94 = vector.broadcast %93 : vector<1x256xf32> to vector<4x256xf32>
    %95 = arith.mulf %90, %94 : vector<4x256xf32>
    %c240_i32_17 = arith.constant 240 : i32
    %96 = tpu.dynamic_rotate %58 by %c240_i32_17 dim 1 : vector<4x256xf32>, i32 -> vector<4x256xf32>
    %97 = vector.extract_strided_slice %2 {offsets = [7, 0], sizes = [1, 256], strides = [1, 1]} : vector<9x256xf32> to vector<1x256xf32>
    %98 = vector.shape_cast %97 : vector<1x256xf32> to vector<256xf32>
    %99 = vector.shape_cast %98 : vector<256xf32> to vector<1x256xf32>
    %100 = vector.broadcast %99 : vector<1x256xf32> to vector<4x256xf32>
    %101 = arith.mulf %96, %100 : vector<4x256xf32>
    %c239_i32_18 = arith.constant 239 : i32
    %102 = tpu.dynamic_rotate %58 by %c239_i32_18 dim 1 : vector<4x256xf32>, i32 -> vector<4x256xf32>
    %103 = vector.extract_strided_slice %2 {offsets = [8, 0], sizes = [1, 256], strides = [1, 1]} : vector<9x256xf32> to vector<1x256xf32>
    %104 = vector.shape_cast %103 : vector<1x256xf32> to vector<256xf32>
    %105 = vector.shape_cast %104 : vector<256xf32> to vector<1x256xf32>
    %106 = vector.broadcast %105 : vector<1x256xf32> to vector<4x256xf32>
    %107 = arith.mulf %102, %106 : vector<4x256xf32>
    %108 = tpu.concatenate %65, %71, %77, %83, %58, %89, %95, %101, %107 in 0 : vector<4x256xf32>, vector<4x256xf32>, vector<4x256xf32>, vector<4x256xf32>, vector<4x256xf32>, vector<4x256xf32>, vector<4x256xf32>, vector<4x256xf32>, vector<4x256xf32> -> vector<36x256xf32>
    %cst_19 = arith.constant dense<0.000000e+00> : vector<4x256xf32>
    %109 = tpu.matmul %59, %108, %cst_19 {dimension_numbers = #tpu.dot_dimension_numbers<[1], [0], [0], [1], [0, 0, 1, 1], [], []>} : vector<4x36xf32>, vector<36x256xf32>, vector<4x256xf32> -> vector<4x256xf32>
    %c0_20 = arith.constant 0 : index
    %c0_21 = arith.constant 0 : index
    %110 = vector.load %arg6[%c0_20, %c0_21] : memref<4x1xf32, #tpu.memory_space<vmem>>, vector<4x1xf32>
    %111 = vector.broadcast %110 : vector<4x1xf32> to vector<4x256xf32>
    %112 = arith.addf %109, %111 : vector<4x256xf32>
    %cst_22 = arith.constant 1.000000e+00 : f32
    %113 = vector.broadcast %cst_22 : f32 to vector<4x256xf32>
    %114 = arith.mulf %112, %113 : vector<4x256xf32>
    %115 = arith.addf %114, %1 : vector<4x256xf32>
    %c0_23 = arith.constant 0 : index
    %c0_24 = arith.constant 0 : index
    %c0_25 = arith.constant 0 : index
    %116 = vector.load %arg7[%c0_23, %c0_24, %c0_25] : memref<1x4x256xf32, #tpu.memory_space<vmem>>, vector<1x4x256xf32>
    %117 = vector.shape_cast %116 : vector<1x4x256xf32> to vector<4x256xf32>
    %118 = vector.shape_cast %115 : vector<4x256xf32> to vector<1x4x256xf32>
    tpu.vector_store %arg7[%c0_23, %c0_24, %c0_25], %118 {strides = array<i32>} : memref<1x4x256xf32, #tpu.memory_space<vmem>>, vector<1x4x256xf32>,
    return
  }
  func.func @transform_0(%arg0: i32) -> (i32, i32, i32) {
    %c0_i32 = arith.constant 0 : i32
    %c0_i32_0 = arith.constant 0 : i32
    %c0_i32_1 = arith.constant 0 : i32
    return %arg0, %c0_i32, %c0_i32_0 : i32, i32, i32
  }
  func.func @transform_1(%arg0: i32) -> (i32, i32) {
    %c0_i32 = arith.constant 0 : i32
    %c0_i32_0 = arith.constant 0 : i32
    %c0_i32_1 = arith.constant 0 : i32
    return %c0_i32, %c0_i32_0 : i32, i32
  }
  func.func @transform_2(%arg0: i32) -> (i32, i32) {
    %c0_i32 = arith.constant 0 : i32
    %c0_i32_0 = arith.constant 0 : i32
    %c0_i32_1 = arith.constant 0 : i32
    return %c0_i32, %c0_i32_0 : i32, i32
  }
  func.func @transform_3(%arg0: i32) -> (i32, i32) {
    %c0_i32 = arith.constant 0 : i32
    %c0_i32_0 = arith.constant 0 : i32
    %c0_i32_1 = arith.constant 0 : i32
    return %c0_i32, %c0_i32_0 : i32, i32
  }
  func.func @transform_4(%arg0: i32) -> (i32, i32) {
    %c0_i32 = arith.constant 0 : i32
    %c0_i32_0 = arith.constant 0 : i32
    %c0_i32_1 = arith.constant 0 : i32
    return %c0_i32, %c0_i32_0 : i32, i32
  }
  func.func @transform_5(%arg0: i32) -> (i32, i32) {
    %c0_i32 = arith.constant 0 : i32
    %c0_i32_0 = arith.constant 0 : i32
    %c0_i32_1 = arith.constant 0 : i32
    return %c0_i32, %c0_i32_0 : i32, i32
  }
  func.func @transform_6(%arg0: i32) -> (i32, i32, i32) {
    %c0_i32 = arith.constant 0 : i32
    %c0_i32_0 = arith.constant 0 : i32
    %c0_i32_1 = arith.constant 0 : i32
    return %arg0, %c0_i32, %c0_i32_0 : i32, i32, i32
  }
}

</mosaic_0001>

<llo_original>
// kernel: tpu_custom_call.1
$region0: #{tpu_custom_call.1}
  #allocation0 [shape = 'u32[]', space=smem, size = 0x4, offset = 0x4, fixed_abs, tag = 'smem constant byte address 0x4 - core index']
  #allocation1 [shape = 'u32[72,128]{1,0:T(1,128)}', space=vmem, size = 0x9000, scoped, tag = 'internal scratch']
  %s0 = inlined_call_operand.hbm [shape: f32[2,4,256], index: 0, kind: input, shape index: {}]
  %s1 = inlined_call_operand.hbm [shape: f32[9,256], index: 1, kind: input, shape index: {}]
  %s2 = inlined_call_operand.vmem [shape: f32[4,36], index: 2, kind: input, shape index: {}]
  %s3 = inlined_call_operand.vmem [shape: f32[4,1], index: 3, kind: input, shape index: {}]
  %s4 = inlined_call_operand.vmem [shape: f32[4,36], index: 4, kind: input, shape index: {}]
  %s5 = inlined_call_operand.vmem [shape: f32[4,1], index: 5, kind: input, shape index: {}]
  %s6 = inlined_call_operand.hbm [shape: f32[2,4,256], index: 6, kind: output, shape index: {}]
  %s7 = sld [smem:[#allocation0]]
  $region65: #{tpu_custom_call.1} parent=0
    _
  %s9 = ssub.s32 1, %s7
  %s10 = scalar_select 0, %s9, %s7
  $region1: #{tpu_custom_call.1} parent=0
    #allocation2 [shape = 'u8[8192]{0}', space=vmem, size = 0x2000, scoped, tag = 'input window, operand 0']
    #allocation3 [shape = 's32[2]{0}', space=sflag, size = 0x8, scoped, tag = 'scoped memory for tpu_custom_call.1']
    #allocation4 [shape = 's32[2]{0}', space=sflag, size = 0x8, scoped, tag = 'scoped memory for tpu_custom_call.1']
    #allocation5 [shape = 'u8[16384]{0}', space=vmem, size = 0x4000, scoped, tag = 'input window, operand 1, single buffered']
    #allocation6 [shape = 's32[1]{0}', space=sflag, size = 0x4, scoped, tag = 'scoped memory for tpu_custom_call.1']
    #allocation7 [shape = 'u8[8192]{0}', space=vmem, size = 0x2000, scoped, tag = 'output window, operand 0']
    %11 = vsyncpa [#allocation3], 0
    %s12 = scalar_lea.sflag [#allocation3], 1
    %13 = vsyncpa %s12, 0
    %14 = vsyncpa [#allocation6], 0
    %15 = vsyncpa [#allocation4], 0
    %s16 = scalar_lea.sflag [#allocation4], 1
    %17 = vsyncpa %s16, 0
    loop: start=0, step=1, limit=4
    $region2: #{tpu_custom_call.1} parent=1 // loop_pre_header
      _
    $region3: #{tpu_custom_call.1} parent=1 // loop_header
      %s19 = sphi 0, %s23
      %p20 = scmp.ge.s32.totalorder %s19, 4
      %s29 = sphi 0, %s31
      %s32 = sphi 0, %s29
      %s33 = sphi 0, %s32
      %s49 = sphi 0, %s33
      %s53 = sphi 0, %s53
      %s55 = sphi 0, %s53
      %s56 = sphi 0, %s55
      %s70 = sphi 0, %s56
      %s74 = sphi 0, %s74
      %s76 = sphi 0, %s74
      %s77 = sphi 0, %s76
      %s91 = sphi 0, %s77
      %s95 = sphi 0, %s95
      %s97 = sphi 0, %s95
      %s98 = sphi 0, %s97
      %s112 = sphi 0, %s98
      %s116 = sphi 0, %s116
      %s118 = sphi 0, %s116
      %s119 = sphi 0, %s118
      %s133 = sphi 0, %s119
      %s137 = sphi 0, %s137
      %s139 = sphi 0, %s137
      %s140 = sphi 0, %s139
      %s154 = sphi 0, %s140
      %s160 = sphi 0, %s162
      %s163 = sphi 0, %s160
      %s164 = sphi 0, %s163
      %s180 = sphi 0, %s164
    $region4: #{tpu_custom_call.1} parent=1 // loop_header_branch
      %22 = sbr.rel (%p20) target = $region8
    $region5: #{tpu_custom_call.1} parent=1 // loop_body
      %s24 = ssub.s32 %s19, 1
      %s25 = ssub.s32 %s19, 2
      %s26 = sadd.s32 %s19, 1
      %s27 = ssub.s32 %s19, %s26
      %p28 = scmp.eq.s32.totalorder %s27, 0
      %s30 = sadd.s32 %s29, 1
      %s31 = scalar_select %p28, %s29, %s30
      %p34 = pneg %p28
      %p35 = scmp.eq.s32.totalorder %s19, 1
      %p36 = por %p34, %p35
      %p37 = scmp.ne.s32.totalorder %s29, %s32
      %p38 = scmp.eq.s32.totalorder %s19, 0
      %p39 = por %p37, %p38
      %p40 = scmp.ne.s32.totalorder %s29, %s32
      %p41 = scmp.eq.s32.totalorder %s24, 1
      %p42 = por %p40, %p41
      %p43 = scmp.ne.s32.totalorder %s32, %s33
      %p44 = scmp.eq.s32.totalorder %s24, 0
      %p45 = por %p43, %p44
      %p46 = scmp.ne.s32.totalorder %s32, %s33
      %p47 = scmp.eq.s32.totalorder %s25, 1
      %p48 = por %p46, %p47
      %p50 = scmp.ne.s32.totalorder %s33, %s49
      %p51 = scmp.eq.s32.totalorder %s25, 0
      %p52 = por %p50, %p51
      %s54 = sadd.s32 %s53, 1
      %p57 = scmp.eq.s32.totalorder %s19, 1
      %p58 = scmp.ne.s32.totalorder %s53, %s55
      %p59 = scmp.eq.s32.totalorder %s19, 0
      %p60 = por %p58, %p59
      %p61 = scmp.ne.s32.totalorder %s53, %s55
      %p62 = scmp.eq.s32.totalorder %s24, 1
      %p63 = por %p61, %p62
      %p64 = scmp.ne.s32.totalorder %s55, %s56
      %p65 = scmp.eq.s32.totalorder %s24, 0
      %p66 = por %p64, %p65
      %p67 = scmp.ne.s32.totalorder %s55, %s56
      %p68 = scmp.eq.s32.totalorder %s25, 1
      %p69 = por %p67, %p68
      %p71 = scmp.ne.s32.totalorder %s56, %s70
      %p72 = scmp.eq.s32.totalorder %s25, 0
      %p73 = por %p71, %p72
      %s75 = sadd.s32 %s74, 1
      %p78 = scmp.eq.s32.totalorder %s19, 1
      %p79 = scmp.ne.s32.totalorder %s74, %s76
      %p80 = scmp.eq.s32.totalorder %s19, 0
      %p81 = por %p79, %p80
      %p82 = scmp.ne.s32.totalorder %s74, %s76
      %p83 = scmp.eq.s32.totalorder %s24, 1
      %p84 = por %p82, %p83
      %p85 = scmp.ne.s32.totalorder %s76, %s77
      %p86 = scmp.eq.s32.totalorder %s24, 0
      %p87 = por %p85, %p86
      %p88 = scmp.ne.s32.totalorder %s76, %s77
      %p89 = scmp.eq.s32.totalorder %s25, 1
      %p90 = por %p88, %p89
      %p92 = scmp.ne.s32.totalorder %s77, %s91
      %p93 = scmp.eq.s32.totalorder %s25, 0
      %p94 = por %p92, %p93
      %s96 = sadd.s32 %s95, 1
      %p99 = scmp.eq.s32.totalorder %s19, 1
      %p100 = scmp.ne.s32.totalorder %s95, %s97
      %p101 = scmp.eq.s32.totalorder %s19, 0
      %p102 = por %p100, %p101
      %p103 = scmp.ne.s32.totalorder %s95, %s97
      %p104 = scmp.eq.s32.totalorder %s24, 1
      %p105 = por %p103, %p104
      %p106 = scmp.ne.s32.totalorder %s97, %s98
      %p107 = scmp.eq.s32.totalorder %s24, 0
      %p108 = por %p106, %p107
      %p109 = scmp.ne.s32.totalorder %s97, %s98
      %p110 = scmp.eq.s32.totalorder %s25, 1
      %p111 = por %p109, %p110
      %p113 = scmp.ne.s32.totalorder %s98, %s112
      %p114 = scmp.eq.s32.totalorder %s25, 0
      %p115 = por %p113, %p114
      %s117 = sadd.s32 %s116, 1
      %p120 = scmp.eq.s32.totalorder %s19, 1
      %p121 = scmp.ne.s32.totalorder %s116, %s118
      %p122 = scmp.eq.s32.totalorder %s19, 0
      %p123 = por %p121, %p122
      %p124 = scmp.ne.s32.totalorder %s116, %s118
      %p125 = scmp.eq.s32.totalorder %s24, 1
      %p126 = por %p124, %p125
      %p127 = scmp.ne.s32.totalorder %s118, %s119
      %p128 = scmp.eq.s32.totalorder %s24, 0
      %p129 = por %p127, %p128
      %p130 = scmp.ne.s32.totalorder %s118, %s119
      %p131 = scmp.eq.s32.totalorder %s25, 1
      %p132 = por %p130, %p131
      %p134 = scmp.ne.s32.totalorder %s119, %s133
      %p135 = scmp.eq.s32.totalorder %s25, 0
      %p136 = por %p134, %p135
      %s138 = sadd.s32 %s137, 1
      %p141 = scmp.eq.s32.totalorder %s19, 1
      %p142 = scmp.ne.s32.totalorder %s137, %s139
      %p143 = scmp.eq.s32.totalorder %s19, 0
      %p144 = por %p142, %p143
      %p145 = scmp.ne.s32.totalorder %s137, %s139
      %p146 = scmp.eq.s32.totalorder %s24, 1
      %p147 = por %p145, %p146
      %p148 = scmp.ne.s32.totalorder %s139, %s140
      %p149 = scmp.eq.s32.totalorder %s24, 0
      %p150 = por %p148, %p149
      %p151 = scmp.ne.s32.totalorder %s139, %s140
      %p152 = scmp.eq.s32.totalorder %s25, 1
      %p153 = por %p151, %p152
      %p155 = scmp.ne.s32.totalorder %s140, %s154
      %p156 = scmp.eq.s32.totalorder %s25, 0
      %p157 = por %p155, %p156
      %s158 = ssub.s32 %s19, %s26
      %p159 = scmp.eq.s32.totalorder %s158, 0
      %s161 = sadd.s32 %s160, 1
      %s162 = scalar_select %p159, %s160, %s161
      %p165 = pneg %p159
      %p166 = scmp.eq.s32.totalorder %s19, 1
      %p167 = por %p165, %p166
      %p168 = scmp.ne.s32.totalorder %s160, %s163
      %p169 = scmp.eq.s32.totalorder %s19, 0
      %p170 = por %p168, %p169
      %p171 = scmp.ne.s32.totalorder %s160, %s163
      %p172 = scmp.eq.s32.totalorder %s24, 1
      %p173 = por %p171, %p172
      %p174 = scmp.ne.s32.totalorder %s163, %s164
      %p175 = scmp.eq.s32.totalorder %s24, 0
      %p176 = por %p174, %p175
      %p177 = scmp.ne.s32.totalorder %s163, %s164
      %p178 = scmp.eq.s32.totalorder %s25, 1
      %p179 = por %p177, %p178
      %p181 = scmp.ne.s32.totalorder %s164, %s180
      %p182 = scmp.eq.s32.totalorder %s25, 0
      %p183 = por %p181, %p182
      %p184 = scmp.le.s32.totalorder 1, %s19
      %p185 = scmp.lt.s32.totalorder %s19, 3
      %p186 = pnand %p184, %p185
      %p187 = pneg %p186
      // Predicated region
      $region9: #{tpu_custom_call.1} parent=5 // pred_check
        _
      $region10: #{tpu_custom_call.1} parent=5 // pred_check_branch
        %189 = sbr.rel (%p186) target = $region12
      $region11: #{tpu_custom_call.1} parent=5 // pred_region
        %s190 = ssub.s32 %s19, 1
        // Predicated region
        $region13: #{tpu_custom_call.1} parent=11 // pred_check
          %p191 = pneg %p66
        $region14: #{tpu_custom_call.1} parent=11 // pred_check_branch
          %193 = sbr.rel (%p191) target = $region16
        $region15: #{tpu_custom_call.1} parent=11 // pred_region
          %195 = vsyncadd [#allocation6], 0
          %s196 = sshll.u32 %s1, 4
          %s197 = int_to_ptr.hbm [resolvable:$true] %s196
          %s198 = sshll.u32 [#allocation5], 4
          %s199 = int_to_ptr.vmem [resolvable:$true] %s198
          %204 = dma.hbm_to_vmem [thread:$0]  %s197, 512, %s199, [#allocation6], 256, 256, 16
        $region16: #{tpu_custom_call.1} parent=11 // pred_fallthru
          _
        // Predicated region
        $region17: #{tpu_custom_call.1} parent=11 // pred_check
          %p205 = pneg %p87
        $region18: #{tpu_custom_call.1} parent=11 // pred_check_branch
          %207 = sbr.rel (%p205) target = $region20
        $region19: #{tpu_custom_call.1} parent=11 // pred_region
          _
        $region20: #{tpu_custom_call.1} parent=11 // pred_fallthru
          _
        // Predicated region
        $region21: #{tpu_custom_call.1} parent=11 // pred_check
          %p208 = pneg %p108
        $region22: #{tpu_custom_call.1} parent=11 // pred_check_branch
          %210 = sbr.rel (%p208) target = $region24
        $region23: #{tpu_custom_call.1} parent=11 // pred_region
          _
        $region24: #{tpu_custom_call.1} parent=11 // pred_fallthru
          _
        // Predicated region
        $region25: #{tpu_custom_call.1} parent=11 // pred_check
          %p211 = pneg %p129
        $region26: #{tpu_custom_call.1} parent=11 // pred_check_branch
          %213 = sbr.rel (%p211) target = $region28
        $region27: #{tpu_custom_call.1} parent=11 // pred_region
          _
        $region28: #{tpu_custom_call.1} parent=11 // pred_fallthru
          _
        // Predicated region
        $region29: #{tpu_custom_call.1} parent=11 // pred_check
          %p214 = pneg %p150
        $region30: #{tpu_custom_call.1} parent=11 // pred_check_branch
          %216 = sbr.rel (%p214) target = $region32
        $region31: #{tpu_custom_call.1} parent=11 // pred_region
          _
        $region32: #{tpu_custom_call.1} parent=11 // pred_fallthru
          _
      $region12: #{tpu_custom_call.1} parent=5 // pred_fallthru
        _
      %p217 = scmp.lt.s32.totalorder %s19, 2
      // Predicated region
      $region33: #{tpu_custom_call.1} parent=5 // pred_check
        %p218 = pneg %p217
      $region34: #{tpu_custom_call.1} parent=5 // pred_check_branch
        %220 = sbr.rel (%p218) target = $region36
      $region35: #{tpu_custom_call.1} parent=5 // pred_region
        // Predicated region
        $region37: #{tpu_custom_call.1} parent=35 // pred_check
          %p221 = pneg %p39
        $region38: #{tpu_custom_call.1} parent=35 // pred_check_branch
          %223 = sbr.rel (%p221) target = $region40
        $region39: #{tpu_custom_call.1} parent=35 // pred_region
          %s224 = sand.u32 %s29, 1
          %s225 = scalar_lea.sflag [#allocation3], %s224
          %s226 = sand.u32 %s29, 1
          %s227 = smul.addr %s226, 8
          %s228 = scalar_lea.vmem [#allocation2], %s227
          %230 = vsyncadd %s225, 0
          %s231 = smul.addr %s19, 2
          %s232 = smul.addr %s231, 4
          %s233 = scalar_lea.hbm %s0, %s232
          %s235 = sshll.u32 %s233, 4
          %s236 = int_to_ptr.hbm [resolvable:$true] %s235
          %s237 = sshll.u32 %s228, 4
          %s238 = int_to_ptr.vmem [resolvable:$true] %s237
          %240 = dma.hbm_to_vmem [thread:$0]  %s236, 128, %s238, %s225
        $region40: #{tpu_custom_call.1} parent=35 // pred_fallthru
          _
      $region36: #{tpu_custom_call.1} parent=5 // pred_fallthru
        _
      %p241 = scmp.le.s32.totalorder 1, %s19
      %p242 = scmp.lt.s32.totalorder %s19, 3
      %p243 = pnand %p241, %p242
      %p244 = pneg %p243
      // Predicated region
      $region41: #{tpu_custom_call.1} parent=5 // pred_check
        _
      $region42: #{tpu_custom_call.1} parent=5 // pred_check_branch
        %246 = sbr.rel (%p243) target = $region44
      $region43: #{tpu_custom_call.1} parent=5 // pred_region
        %s247 = ssub.s32 %s19, 1
        %s248 = sand.u32 %s32, 1
        %s249 = scalar_lea.sflag [#allocation3], %s248
        %s250 = sand.u32 %s32, 1
        %s251 = smul.addr %s250, 8
        %s252 = scalar_lea.vmem [#allocation2], %s251
        // Predicated region
        $region45: #{tpu_custom_call.1} parent=43 // pred_check
          %p253 = pneg %p45
        $region46: #{tpu_custom_call.1} parent=43 // pred_check_branch
          %255 = sbr.rel (%p253) target = $region48
        $region47: #{tpu_custom_call.1} parent=43 // pred_region
          %257 = dma.done %s249, 128
        $region48: #{tpu_custom_call.1} parent=43 // pred_fallthru
          _
        // Predicated region
        $region49: #{tpu_custom_call.1} parent=43 // pred_check
          %p258 = pneg %p66
        $region50: #{tpu_custom_call.1} parent=43 // pred_check_branch
          %260 = sbr.rel (%p258) target = $region52
        $region51: #{tpu_custom_call.1} parent=43 // pred_region
          %262 = dma.done [#allocation6], 512
        $region52: #{tpu_custom_call.1} parent=43 // pred_fallthru
          _
        %s263 = sand.u32 %s32, 1
        %s264 = scalar_lea.sflag [#allocation3], %s263
        %s265 = sand.u32 %s32, 1
        %s266 = smul.addr %s265, 8
        %s267 = scalar_lea.vmem [#allocation2], %s266
        %p268 = pneg %p45
        %p269 = pneg %p42
        %p270 = pneg %p66
        %p271 = pneg %p63
        %p272 = pneg %p87
        %p273 = pneg %p84
        %p274 = pneg %p108
        %p275 = pneg %p105
        %p276 = pneg %p129
        %p277 = pneg %p126
        %p278 = pneg %p150
        %p279 = pneg %p147
        %p280 = pneg %p176
        %p281 = pneg %p173
        %s282 = sand.u32 %s163, 1
        %s283 = scalar_lea.sflag [#allocation4], %s282
        %s284 = sand.u32 %s163, 1
        %s285 = smul.addr %s284, 8
        %s286 = scalar_lea.vmem [#allocation7], %s285
        %v287 = vld [vmem:[%s252] sm:$0xff]
        %v288 = vld [vmem:[#allocation5] sm:$0xff]
        %v289 = vld [vmem:[#allocation5 + $0x8] sm:$0xff]
        %v290 = vld [vmem:[#allocation5 + $0x10] sm:$0x1]
        %v291 = vld [vmem:[#allocation5 + $0x18] sm:$0x1]
        %v292 = vld [vmem:[%s2] sm:$0xf]
        %294 = vst [vmem:[#allocation1] ss:$2 sm:$0xff] %v287
        %v295 = vld.sshfl [vmem:[#allocation1] sm:$0xff pattern:$0x75316420]
        %v296 = vld.sshfl [vmem:[#allocation1 + $0x8] sm:$0xff pattern:$0x75316420]
        %299 = vrot.lane.b32.xlu0 %v295, 17
        %v300 = vpop.permute.xlu0 %299
        %301 = vrot.lane.b32.xlu0 %v296, 17
        %v302 = vpop.permute.xlu0 %301
        %v303 = vlaneseq
        %v304 = vand.u32 %v303, 127
        %vm305 = vcmp.lt.s32.totalorder %v304, 17
        %v306 = vsel %vm305, %v300, %v302
        %v307 = vsel %vm305, %v302, %v300
        %v308 = vperm.slane %v288, 0
        %v309 = vperm.slane %v289, 0
        %v310 = vmul.f32 %v307, %v308
        %v311 = vmul.f32 %v306, %v309
        %312 = vst [vmem:[#allocation1] ss:$2 sm:$0xff] %v287
        %v313 = vld.sshfl [vmem:[#allocation1] sm:$0xff pattern:$0x75316420]
        %v314 = vld.sshfl [vmem:[#allocation1 + $0x8] sm:$0xff pattern:$0x75316420]
        %317 = vrot.lane.b32.xlu0 %v313, 16
        %v318 = vpop.permute.xlu0 %317
        %319 = vrot.lane.b32.xlu0 %v314, 16
        %v320 = vpop.permute.xlu0 %319
        %vm321 = vcmp.lt.s32.totalorder %v304, 16
        %v322 = vsel %vm321, %v318, %v320
        %v323 = vsel %vm321, %v320, %v318
        %v324 = vperm.slane %v288, 1
        %v325 = vperm.slane %v289, 1
        %v326 = vmul.f32 %v323, %v324
        %v327 = vmul.f32 %v322, %v325
        %328 = vst [vmem:[#allocation1] ss:$2 sm:$0xff] %v287
        %v329 = vld.sshfl [vmem:[#allocation1] sm:$0xff pattern:$0x75316420]
        %v330 = vld.sshfl [vmem:[#allocation1 + $0x8] sm:$0xff pattern:$0x75316420]
        %333 = vrot.lane.b32.xlu0 %v329, 15
        %v334 = vpop.permute.xlu0 %333
        %335 = vrot.lane.b32.xlu0 %v330, 15
        %v336 = vpop.permute.xlu0 %335
        %vm337 = vcmp.lt.s32.totalorder %v304, 15
        %v338 = vsel %vm337, %v334, %v336
        %v339 = vsel %vm337, %v336, %v334
        %v340 = vperm.slane %v288, 2
        %v341 = vperm.slane %v289, 2
        %v342 = vmul.f32 %v339, %v340
        %v343 = vmul.f32 %v338, %v341
        %344 = vst [vmem:[#allocation1] ss:$2 sm:$0xff] %v287
        %v345 = vld.sshfl [vmem:[#allocation1] sm:$0xff pattern:$0x75316420]
        %v346 = vld.sshfl [vmem:[#allocation1 + $0x8] sm:$0xff pattern:$0x75316420]
        %349 = vrot.lane.b32.xlu0 %v345, 1
        %v350 = vpop.permute.xlu0 %349
        %351 = vrot.lane.b32.xlu0 %v346, 1
        %v352 = vpop.permute.xlu0 %351
        %vm353 = vcmp.lt.s32.totalorder %v304, 1
        %v354 = vsel %vm353, %v350, %v352
        %v355 = vsel %vm353, %v352, %v350
        %v356 = vperm.slane %v288, 3
        %v357 = vperm.slane %v289, 3
        %v358 = vmul.f32 %v355, %v356
        %v359 = vmul.f32 %v354, %v357
        %360 = vst [vmem:[#allocation1] ss:$2 sm:$0xff] %v287
        %v361 = vld.sshfl [vmem:[#allocation1] sm:$0xff pattern:$0x75316420]
        %v362 = vld.sshfl [vmem:[#allocation1 + $0x8] sm:$0xff pattern:$0x75316420]
        %365 = vrot.lane.b32.xlu0 %v361, 127
        %v366 = vpop.permute.xlu0 %365
        %367 = vrot.lane.b32.xlu0 %v362, 127
        %v368 = vpop.permute.xlu0 %367
        %vm369 = vcmp.lt.s32.totalorder %v304, 127
        %v370 = vsel %vm369, %v366, %v368
        %v371 = vsel %vm369, %v368, %v366
        %v372 = vperm.slane %v288, 5
        %v373 = vperm.slane %v289, 5
        %v374 = vmul.f32 %v370, %v372
        %v375 = vmul.f32 %v371, %v373
        %376 = vst [vmem:[#allocation1] ss:$2 sm:$0xff] %v287
        %v377 = vld.sshfl [vmem:[#allocation1] sm:$0xff pattern:$0x75316420]
        %v378 = vld.sshfl [vmem:[#allocation1 + $0x8] sm:$0xff pattern:$0x75316420]
        %381 = vrot.lane.b32.xlu0 %v377, 113
        %v382 = vpop.permute.xlu0 %381
        %383 = vrot.lane.b32.xlu0 %v378, 113
        %v384 = vpop.permute.xlu0 %383
        %vm385 = vcmp.lt.s32.totalorder %v304, 113
        %v386 = vsel %vm385, %v382, %v384
        %v387 = vsel %vm385, %v384, %v382
        %v388 = vperm.slane %v288, 6
        %v389 = vperm.slane %v289, 6
        %v390 = vmul.f32 %v386, %v388
        %v391 = vmul.f32 %v387, %v389
        %392 = vst [vmem:[#allocation1] ss:$2 sm:$0xff] %v287
        %v393 = vld.sshfl [vmem:[#allocation1] sm:$0xff pattern:$0x75316420]
        %v394 = vld.sshfl [vmem:[#allocation1 + $0x8] sm:$0xff pattern:$0x75316420]
        %397 = vrot.lane.b32.xlu0 %v393, 112
        %v398 = vpop.permute.xlu0 %397
        %399 = vrot.lane.b32.xlu0 %v394, 112
        %v400 = vpop.permute.xlu0 %399
        %vm401 = vcmp.lt.s32.totalorder %v304, 112
        %v402 = vsel %vm401, %v398, %v400
        %v403 = vsel %vm401, %v400, %v398
        %v404 = vperm.slane %v288, 7
        %v405 = vperm.slane %v289, 7
        %v406 = vmul.f32 %v402, %v404
        %v407 = vmul.f32 %v403, %v405
        %408 = vst [vmem:[#allocation1] ss:$2 sm:$0xff] %v287
        %v409 = vld.sshfl [vmem:[#allocation1] sm:$0xff pattern:$0x75316420]
        %v410 = vld.sshfl [vmem:[#allocation1 + $0x8] sm:$0xff pattern:$0x75316420]
        %413 = vrot.lane.b32.xlu0 %v409, 111
        %v414 = vpop.permute.xlu0 %413
        %415 = vrot.lane.b32.xlu0 %v410, 111
        %v416 = vpop.permute.xlu0 %415
        %vm417 = vcmp.lt.s32.totalorder %v304, 111
        %v418 = vsel %vm417, %v414, %v416
        %v419 = vsel %vm417, %v416, %v414
        %v420 = vperm.slane %v290, 0
        %v421 = vperm.slane %v291, 0
        %v422 = vmul.f32 %v418, %v420
        %v423 = vmul.f32 %v419, %v421
        %v426 = vrot.slane %v326, 4
        %v427 = vrot.slane %v327, 4
        %v432 = vrot.slane %v358, 4
        %v433 = vrot.slane %v359, 4
        %436 = vst [vmem:[#allocation1] ss:$2 sm:$0xff] %v287
        %v437 = vld.sshfl [vmem:[#allocation1] sm:$0xff pattern:$0x75316420]
        %v438 = vld.sshfl [vmem:[#allocation1 + $0x8] sm:$0xff pattern:$0x75316420]
        %v443 = vrot.slane %v374, 4
        %v444 = vrot.slane %v375, 4
        %v449 = vrot.slane %v406, 4
        %v450 = vrot.slane %v407, 4
        %vm453 = vcmask 1043456
        %v454 = vsel %vm453, %v310, %v426
        %v455 = vsel %vm453, %v311, %v427
        %v456 = vsel %vm453, %v342, %v432
        %v457 = vsel %vm453, %v343, %v433
        %v458 = vsel %vm453, %v437, %v443
        %v459 = vsel %vm453, %v438, %v444
        %v460 = vsel %vm453, %v390, %v449
        %v461 = vsel %vm453, %v391, %v450
        %v462 = vld [vmem:[%s3] sm:$0xf]
        %464 = vset.pattern.permute.xlu0 0
        %465 = vperm.xlu0 %464, %v462
        %v466 = vpop.permute.xlu0 %465
        %vm468 = vcmask 293888
        %v470 = vsel %vm468, %v292, 0
        %v473 = vsel %vm453, %v422, 0
        %v476 = vsel %vm453, %v423, 0
        %478 = vmatpush.msra.mxu0 0.0
        %479 = vmatpush.msra.mxu0 0.0
        %480 = vmatpush.msra.mxu0 0.0
        %481 = vmatpush.msra.mxu0 0.0
        %482 = vmatpush.msra.mxu0 0.0
        %483 = vmatpush.msra.mxu0 0.0
        %484 = vmatpush.msra.mxu0 0.0
        %485 = vmatpush.msra.mxu0 0.0
        %486 = vmatpush.msra.mxu0 0.0
        %487 = vmatpush.msra.mxu0 0.0
        %488 = vmatpush.msra.mxu0 0.0
        %489 = vmatpush.msra.mxu0 %v473
        %490 = vmatpush.msra.mxu0 %v460
        %491 = vmatpush.msra.mxu0 %v458
        %492 = vmatpush.msra.mxu0 %v456
        %493 = vmatpush.msra.mxu0 %v454
        %494 = vmatmul.f32.gmra.mxu0 %v470
        %v495 = vpop.f32.mrf.mxu0
        %v496 = vadd.f32 %v466, %v495
        %497 = vdwg.mxu0
        %498 = vmatpush.msra.mxu0 0.0
        %499 = vmatpush.msra.mxu0 0.0
        %500 = vmatpush.msra.mxu0 0.0
        %501 = vmatpush.msra.mxu0 0.0
        %502 = vmatpush.msra.mxu0 0.0
        %503 = vmatpush.msra.mxu0 0.0
        %504 = vmatpush.msra.mxu0 0.0
        %505 = vmatpush.msra.mxu0 0.0
        %506 = vmatpush.msra.mxu0 0.0
        %507 = vmatpush.msra.mxu0 0.0
        %508 = vmatpush.msra.mxu0 0.0
        %509 = vmatpush.msra.mxu0 %v476
        %510 = vmatpush.msra.mxu0 %v461
        %511 = vmatpush.msra.mxu0 %v459
        %512 = vmatpush.msra.mxu0 %v457
        %513 = vmatpush.msra.mxu0 %v455
        %514 = vmatmul.f32.gmra.mxu0 %v470
        %v515 = vpop.f32.mrf.mxu0
        %v516 = vadd.f32 %v466, %v515
        %517 = vdwg.mxu0
        %v518 = vmax.f32 %v496, 0.0
        %v519 = vmax.f32 %v516, 0.0
        %v520 = vld [vmem:[%s4] sm:$0xf]
        %521 = vrot.lane.b32.xlu0 %v518, 17
        %v522 = vpop.permute.xlu0 %521
        %523 = vrot.lane.b32.xlu0 %v519, 17
        %v524 = vpop.permute.xlu0 %523
        %v525 = vsel %vm305, %v522, %v524
        %v526 = vsel %vm305, %v524, %v522
        %v527 = vmul.f32 %v526, %v308
        %v528 = vmul.f32 %v525, %v309
        %529 = vrot.lane.b32.xlu0 %v518, 16
        %v530 = vpop.permute.xlu0 %529
        %531 = vrot.lane.b32.xlu0 %v519, 16
        %v532 = vpop.permute.xlu0 %531
        %v533 = vsel %vm321, %v530, %v532
        %v534 = vsel %vm321, %v532, %v530
        %v535 = vmul.f32 %v534, %v324
        %v536 = vmul.f32 %v533, %v325
        %537 = vrot.lane.b32.xlu0 %v518, 15
        %v538 = vpop.permute.xlu0 %537
        %539 = vrot.lane.b32.xlu0 %v519, 15
        %v540 = vpop.permute.xlu0 %539
        %v541 = vsel %vm337, %v538, %v540
        %v542 = vsel %vm337, %v540, %v538
        %v543 = vmul.f32 %v542, %v340
        %v544 = vmul.f32 %v541, %v341
        %545 = vrot.lane.b32.xlu0 %v518, 1
        %v546 = vpop.permute.xlu0 %545
        %547 = vrot.lane.b32.xlu0 %v519, 1
        %v548 = vpop.permute.xlu0 %547
        %v549 = vsel %vm353, %v546, %v548
        %v550 = vsel %vm353, %v548, %v546
        %v551 = vmul.f32 %v550, %v356
        %v552 = vmul.f32 %v549, %v357
        %553 = vrot.lane.b32.xlu0 %v518, 127
        %v554 = vpop.permute.xlu0 %553
        %555 = vrot.lane.b32.xlu0 %v519, 127
        %v556 = vpop.permute.xlu0 %555
        %v557 = vsel %vm369, %v554, %v556
        %v558 = vsel %vm369, %v556, %v554
        %v559 = vmul.f32 %v557, %v372
        %v560 = vmul.f32 %v558, %v373
        %561 = vrot.lane.b32.xlu0 %v518, 113
        %v562 = vpop.permute.xlu0 %561
        %563 = vrot.lane.b32.xlu0 %v519, 113
        %v564 = vpop.permute.xlu0 %563
        %v565 = vsel %vm385, %v562, %v564
        %v566 = vsel %vm385, %v564, %v562
        %v567 = vmul.f32 %v565, %v388
        %v568 = vmul.f32 %v566, %v389
        %569 = vrot.lane.b32.xlu0 %v518, 112
        %v570 = vpop.permute.xlu0 %569
        %571 = vrot.lane.b32.xlu0 %v519, 112
        %v572 = vpop.permute.xlu0 %571
        %v573 = vsel %vm401, %v570, %v572
        %v574 = vsel %vm401, %v572, %v570
        %v575 = vmul.f32 %v573, %v404
        %v576 = vmul.f32 %v574, %v405
        %577 = vrot.lane.b32.xlu0 %v518, 111
        %v578 = vpop.permute.xlu0 %577
        %579 = vrot.lane.b32.xlu0 %v519, 111
        %v580 = vpop.permute.xlu0 %579
        %v581 = vsel %vm417, %v578, %v580
        %v582 = vsel %vm417, %v580, %v578
        %v583 = vmul.f32 %v581, %v420
        %v584 = vmul.f32 %v582, %v421
        %v587 = vrot.slane %v535, 4
        %v588 = vrot.slane %v536, 4
        %v593 = vrot.slane %v551, 4
        %v594 = vrot.slane %v552, 4
        %v599 = vrot.slane %v559, 4
        %v600 = vrot.slane %v560, 4
        %v605 = vrot.slane %v575, 4
        %v606 = vrot.slane %v576, 4
        %v609 = vsel %vm453, %v527, %v587
        %v610 = vsel %vm453, %v528, %v588
        %v611 = vsel %vm453, %v543, %v593
        %v612 = vsel %vm453, %v544, %v594
        %v613 = vsel %vm453, %v518, %v599
        %v614 = vsel %vm453, %v519, %v600
        %v615 = vsel %vm453, %v567, %v605
        %v616 = vsel %vm453, %v568, %v606
        %v617 = vld [vmem:[%s5] sm:$0xf]
        %619 = vset.pattern.permute.xlu0 0
        %620 = vperm.xlu0 %619, %v617
        %v621 = vpop.permute.xlu0 %620
        %v624 = vsel %vm468, %v520, 0
        %v627 = vsel %vm453, %v583, 0
        %v630 = vsel %vm453, %v584, 0
        %632 = vmatpush.msra.mxu0 0.0
        %633 = vmatpush.msra.mxu0 0.0
        %634 = vmatpush.msra.mxu0 0.0
        %635 = vmatpush.msra.mxu0 0.0
        %636 = vmatpush.msra.mxu0 0.0
        %637 = vmatpush.msra.mxu0 0.0
        %638 = vmatpush.msra.mxu0 0.0
        %639 = vmatpush.msra.mxu0 0.0
        %640 = vmatpush.msra.mxu0 0.0
        %641 = vmatpush.msra.mxu0 0.0
        %642 = vmatpush.msra.mxu0 0.0
        %643 = vmatpush.msra.mxu0 %v627
        %644 = vmatpush.msra.mxu0 %v615
        %645 = vmatpush.msra.mxu0 %v613
        %646 = vmatpush.msra.mxu0 %v611
        %647 = vmatpush.msra.mxu0 %v609
        %648 = vmatmul.f32.gmra.mxu0 %v624
        %v649 = vpop.f32.mrf.mxu0
        %v650 = vadd.f32 %v621, %v649
        %651 = vdwg.mxu0
        %652 = vmatpush.msra.mxu0 0.0
        %653 = vmatpush.msra.mxu0 0.0
        %654 = vmatpush.msra.mxu0 0.0
        %655 = vmatpush.msra.mxu0 0.0
        %656 = vmatpush.msra.mxu0 0.0
        %657 = vmatpush.msra.mxu0 0.0
        %658 = vmatpush.msra.mxu0 0.0
        %659 = vmatpush.msra.mxu0 0.0
        %660 = vmatpush.msra.mxu0 0.0
        %661 = vmatpush.msra.mxu0 0.0
        %662 = vmatpush.msra.mxu0 0.0
        %663 = vmatpush.msra.mxu0 %v630
        %664 = vmatpush.msra.mxu0 %v616
        %665 = vmatpush.msra.mxu0 %v614
        %666 = vmatpush.msra.mxu0 %v612
        %667 = vmatpush.msra.mxu0 %v610
        %668 = vmatmul.f32.gmra.mxu0 %v624
        %v669 = vpop.f32.mrf.mxu0
        %v670 = vadd.f32 %v621, %v669
        %671 = vdwg.mxu0
        %672 = vst [vmem:[#allocation1] ss:$2 sm:$0xff] %v287
        %v673 = vld.sshfl [vmem:[#allocation1] sm:$0xff pattern:$0x75316420]
        %v674 = vld.sshfl [vmem:[#allocation1 + $0x8] sm:$0xff pattern:$0x75316420]
        %v677 = vadd.f32 %v650, %v673
        %v678 = vadd.f32 %v670, %v674
        %v681 = vrot.slane %v678, 4
        %v682 = vsel %vm453, %v677, %v681
        %684 = vst [vmem:[%s286] sm:$0xff] %v682
        %s685 = sand.u32 %s163, 1
        %s686 = scalar_lea.sflag [#allocation4], %s685
        %s687 = sand.u32 %s163, 1
        %s688 = smul.addr %s687, 8
        %s689 = scalar_lea.vmem [#allocation7], %s688
        // Predicated region
        $region53: #{tpu_custom_call.1} parent=43 // pred_check
          %p690 = pneg %p173
        $region54: #{tpu_custom_call.1} parent=43 // pred_check_branch
          %692 = sbr.rel (%p690) target = $region56
        $region55: #{tpu_custom_call.1} parent=43 // pred_region
          %694 = vsyncadd %s686, 0
          %s695 = smul.addr %s24, 2
          %s696 = smul.addr %s695, 4
          %s697 = scalar_lea.hbm %s6, %s696
          %s699 = sshll.u32 %s689, 4
          %s700 = int_to_ptr.vmem [resolvable:$true] %s699
          %s701 = sshll.u32 %s697, 4
          %s702 = int_to_ptr.hbm [resolvable:$true] %s701
          %704 = dma.vmem_to_hbm [thread:$0]  %s700, 128, %s702, %s686
        $region56: #{tpu_custom_call.1} parent=43 // pred_fallthru
          _
      $region44: #{tpu_custom_call.1} parent=5 // pred_fallthru
        _
      %p705 = scmp.le.s32.totalorder 2, %s19
      // Predicated region
      $region57: #{tpu_custom_call.1} parent=5 // pred_check
        %p706 = pneg %p705
      $region58: #{tpu_custom_call.1} parent=5 // pred_check_branch
        %708 = sbr.rel (%p706) target = $region60
      $region59: #{tpu_custom_call.1} parent=5 // pred_region
        %s709 = ssub.s32 %s19, 2
        // Predicated region
        $region61: #{tpu_custom_call.1} parent=59 // pred_check
          %p710 = pneg %p179
        $region62: #{tpu_custom_call.1} parent=59 // pred_check_branch
          %712 = sbr.rel (%p710) target = $region64
        $region63: #{tpu_custom_call.1} parent=59 // pred_region
          %s713 = sand.u32 %s164, 1
          %s714 = scalar_lea.sflag [#allocation4], %s713
          %s715 = sand.u32 %s164, 1
          %s716 = smul.addr %s715, 8
          %s717 = scalar_lea.vmem [#allocation7], %s716
          %719 = dma.done %s714, 128
        $region64: #{tpu_custom_call.1} parent=59 // pred_fallthru
          _
      $region60: #{tpu_custom_call.1} parent=5 // pred_fallthru
        _
    $region6: #{tpu_custom_call.1} parent=1 // loop_footer
      %s23 = sadd.s32 1, %s19
    $region7: #{tpu_custom_call.1} parent=1 // loop_footer_branch
      %18 = sbr.rel target = $region3
    $region8: #{tpu_custom_call.1} parent=1 // loop_exit
      _
    %720 = vsyncpa [#allocation3], 1
    %s721 = scalar_lea.sflag [#allocation3], 1
    %722 = vsyncpa %s721, 1
    %723 = vsyncpa [#allocation6], 1
    %724 = vsyncpa [#allocation4], 1
    %s725 = scalar_lea.sflag [#allocation4], 1
    %726 = vsyncpa %s725, 1

</llo_original>
